<compile_context>
chip_gen: v6e
topology: v6e:2x2x1
jax: 0.10.0
libtpu: 0.0.40
codegen_flags: <defaults>
</compile_context>

<pallas_src>
import functools

import jax
import jax.numpy as jnp
from jax import lax
from jax.experimental import pallas as pl
from jax.experimental.pallas import tpu as pltpu

LANES = 128
SUBLANES = 8
N_PARALLEL = 2          # leading "parallel" grid axis (2 TCs on v7x; ~free elsewhere)
MAX_TILE_ROWS = 2048    # 2048x128 f32 = 1 MiB per stream per buffer; 3 streams
                        # double-buffered = 6 MiB -> fits v5e's 16 MiB scoped VMEM.
FP_MAX_TILE_ROWS = 512  # fake_pred (discriminator logits) tile; usually 1 tiny block.
BIG_PAD = 1.0e30        # softplus(-BIG_PAD) == 0 exactly with the stable formulation
                        # (finite, so no inf - inf = NaN).


def _cdiv(a, b):
    return -(-a // b)


def _round_up(a, b):
    return _cdiv(a, b) * b


def _image_slab(x):
    """Lane-dense (rows, 128) view.  Zero-copy (pure reshape) when numel % 128 == 0
    and there is at least one full (8,128) tile; tiny zero-pad fallback otherwise."""
    flat = x.reshape(-1)
    n = flat.size
    valid_rows = _cdiv(n, LANES)
    if n % LANES == 0 and valid_rows >= SUBLANES:
        return flat.reshape(valid_rows, LANES), valid_rows
    rows_p = _round_up(max(valid_rows, SUBLANES), SUBLANES)
    flat = jnp.pad(flat, (0, rows_p * LANES - n))          # zeros: |0-0| contributes 0
    return flat.reshape(rows_p, LANES), valid_rows


def _fake_pred_slab(x, tile_rows):
    """(rows, 128) slab padded with BIG_PAD to a whole number of tiles so the BCE
    path never needs a tail mask (fake_pred is small; this pad is cheap)."""
    flat = x.reshape(-1)
    n = flat.size
    rows = _cdiv(n, LANES)
    rows_p = _round_up(max(rows, tile_rows), tile_rows)
    target = rows_p * LANES
    if target != n:
        flat = jnp.pad(flat, (0, target - n), constant_values=BIG_PAD)
    return flat.reshape(rows_p, LANES), rows_p // tile_rows


def _pick_chunk(tile_rows):
    for c in (64, 32, 16):
        if tile_rows % c == 0:
            return c
    return SUBLANES


def _make_kernel(*, bpc, tile_rows, n_img_blocks, img_valid_rows,
                 fp_tile_rows, n_fp_blocks, beta, gamma):
    chunk = _pick_chunk(tile_rows)
    n_steps = tile_rows // chunk
    last_valid = img_valid_rows - (n_img_blocks - 1) * tile_rows
    mask_rows = None if last_valid == tile_rows else last_valid   # static

    def kernel(iden_ref, cyc_ref, real_ref, fp_ref, l1_ref, bce_ref):
        p = pl.program_id(0)
        b = pl.program_id(1)
        gb = p * bpc + b                        # global block id

        @pl.when(b == 0)
        def _():
            l1_ref[...] = jnp.zeros_like(l1_ref)
            bce_ref[...] = jnp.zeros_like(bce_ref)

        def l1_block_sum(valid_rows):
            # Chunked accumulation: keeps live intermediates to a few vregs even at
            # 2048-row tiles; pl.multiple_of gives aligned sublane loads.
            def body(i, acc):
                i0 = pl.multiple_of(i * chunk, chunk)
                r = real_ref[pl.ds(i0, chunk), :].astype(jnp.float32)
                w = (beta * jnp.abs(iden_ref[pl.ds(i0, chunk), :].astype(jnp.float32) - r)
                     + gamma * jnp.abs(cyc_ref[pl.ds(i0, chunk), :].astype(jnp.float32) - r))
                if valid_rows is not None:
                    # Row-only tail mask (edge blocks hold undefined data).
                    ridx = i0 + lax.broadcasted_iota(jnp.int32, (chunk, 1), 0)
                    w = jnp.where(ridx < valid_rows, w, 0.0)
                return acc + jnp.sum(
                    w.reshape(chunk // SUBLANES, SUBLANES, LANES), axis=0)
            return lax.fori_loop(0, n_steps, body,
                                 jnp.zeros((SUBLANES, LANES), jnp.float32),
                                 unroll=n_steps <= 8)

        # ---- weighted L1 over the image tensors -----------------------------------
        # Interior blocks take the unmasked fast path; only the single tail block pays
        # for the mask.  Blocks with gb >= n_img_blocks (grid round-up) are skipped.
        if n_img_blocks > 1:
            @pl.when(gb < n_img_blocks - 1)
            def _():
                l1_ref[...] += l1_block_sum(None)

        @pl.when(gb == n_img_blocks - 1)
        def _():
            l1_ref[...] += l1_block_sum(mask_rows)

        # ---- BCE-with-logits vs target=1: sum(softplus(-x)) -----------------------
        # fake_pred's pad is BIG_PAD, whose stable softplus is exactly 0 -> no mask.
        @pl.when(gb < n_fp_blocks)
        def _():
            x = fp_ref[...].astype(jnp.float32)
            v = jnp.maximum(x, 0.0) - x + jnp.log1p(jnp.exp(-jnp.abs(x)))
            bce_ref[...] += jnp.sum(
                v.reshape(fp_tile_rows // SUBLANES, SUBLANES, LANES), axis=0)

    return kernel


@functools.partial(jax.jit, static_argnames=("alpha", "beta", "gamma"))
def generator_loss(fake_pred, iden, cycle, real, alpha=1.0, beta=10.0, gamma=10.0):
    n_fp = fake_pred.size
    n_img = real.size
    assert iden.size == n_img and cycle.size == n_img

    id_slab, img_valid_rows = _image_slab(iden)
    cy_slab, _ = _image_slab(cycle)
    re_slab, _ = _image_slab(real)

    tile_rows = min(MAX_TILE_ROWS, _round_up(img_valid_rows, SUBLANES))
    n_img_blocks = _cdiv(img_valid_rows, tile_rows)

    fp_rows = _cdiv(n_fp, LANES)
    fp_tile_rows = min(FP_MAX_TILE_ROWS, _round_up(fp_rows, SUBLANES))
    fp_slab, n_fp_blocks = _fake_pred_slab(fake_pred, fp_tile_rows)

    bpc = _cdiv(max(n_img_blocks, n_fp_blocks), N_PARALLEL)   # blocks per parallel slot

    kernel = _make_kernel(
        bpc=bpc, tile_rows=tile_rows, n_img_blocks=n_img_blocks,
        img_valid_rows=img_valid_rows, fp_tile_rows=fp_tile_rows,
        n_fp_blocks=n_fp_blocks, beta=float(beta), gamma=float(gamma))

    # Clamped index maps: grid may overshoot by <= N_PARALLEL-1 blocks; out-of-range
    # steps keep the last block index (no re-DMA) and skip compute via pl.when.
    img_map = lambda p, b: (jnp.minimum(p * bpc + b, n_img_blocks - 1), 0)
    fp_map = lambda p, b: (jnp.minimum(p * bpc + b, n_fp_blocks - 1), 0)
    out_map = lambda p, b: (p, 0)

    img_spec = pl.BlockSpec((tile_rows, LANES), img_map)
    in_specs = [img_spec, img_spec, img_spec,
                pl.BlockSpec((fp_tile_rows, LANES), fp_map)]
    out_specs = (pl.BlockSpec((SUBLANES, LANES), out_map),
                 pl.BlockSpec((SUBLANES, LANES), out_map))
    out_shape = (jax.ShapeDtypeStruct((N_PARALLEL * SUBLANES, LANES), jnp.float32),
                 jax.ShapeDtypeStruct((N_PARALLEL * SUBLANES, LANES), jnp.float32))

    cost = pl.CostEstimate(
        flops=int(8 * n_img + 6 * n_fp),
        transcendentals=int(2 * n_fp),
        bytes_accessed=int(4 * LANES * (3 * id_slab.shape[0] + fp_slab.shape[0])
                           + 2 * 4 * N_PARALLEL * SUBLANES * LANES),
    )

    l1_partials, bce_partials = pl.pallas_call(
        kernel,
        out_shape=out_shape,
        grid_spec=pltpu.PrefetchScalarGridSpec(
            num_scalar_prefetch=0,
            grid=(N_PARALLEL, bpc),
            in_specs=in_specs,
            out_specs=out_specs,
        ),
        compiler_params=pltpu.CompilerParams(
            dimension_semantics=("parallel", "arbitrary")),
        cost_estimate=cost,
    )(id_slab, cy_slab, re_slab, fp_slab)

    # Single divide by the true element counts (beta/gamma already applied in-kernel).
    adv_loss = jnp.sum(bce_partials) / n_fp
    weighted_l1 = jnp.sum(l1_partials) / n_img
    return float(alpha) * adv_loss + weighted_l1


def _reference_loss(fake_pred, iden, cycle, real, alpha=1.0, beta=10.0, gamma=10.0):
    x = fake_pred.astype(jnp.float32)
    adv = jnp.mean(jnp.maximum(x, 0.0) - x + jnp.log1p(jnp.exp(-jnp.abs(x))))
    il = jnp.mean(jnp.abs(iden - real))
    cl = jnp.mean(jnp.abs(cycle - real))
    return alpha * adv + beta * il + gamma * cl


if __name__ == "__main__":
    key = jax.random.PRNGKey(0)
    k1, k2, k3, k4 = jax.random.split(key, 4)

    # fake_pred: discriminator logits (N, 1, H, W); images: (N, C, H, W)
    fake_pred = jax.random.normal(k1, (2, 1, 16, 16), dtype=jnp.float32)
    iden = jax.random.normal(k2, (2, 4, 16, 16), dtype=jnp.float32)
    cycle = jax.random.normal(k3, (2, 4, 16, 16), dtype=jnp.float32)
    real = jax.random.normal(k4, (2, 4, 16, 16), dtype=jnp.float32)

    loss = generator_loss(fake_pred, iden, cycle, real, alpha=1.0, beta=10.0, gamma=10.0)
    jax.block_until_ready(loss)

    ref = _reference_loss(fake_pred, iden, cycle, real, alpha=1.0, beta=10.0, gamma=10.0)
    assert jnp.allclose(loss, ref, rtol=1e-5, atol=1e-5), (loss, ref)

    print("KERNEL_OK")
</pallas_src>

<mosaic_0001>
module attributes {stable_mosaic.version = 11 : i64} {
  func.func @kernel(%arg0: i32, %arg1: i32, %arg2: memref<16x128xf32, #tpu.memory_space<vmem>>, %arg3: memref<16x128xf32, #tpu.memory_space<vmem>>, %arg4: memref<16x128xf32, #tpu.memory_space<vmem>>, %arg5: memref<8x128xf32, #tpu.memory_space<vmem>>, %arg6: memref<8x128xf32, #tpu.memory_space<vmem>>, %arg7: memref<8x128xf32, #tpu.memory_space<vmem>>) attributes {dimension_semantics = [#tpu.dimension_semantics<parallel>, #tpu.dimension_semantics<arbitrary>], iteration_bounds = array<i64: 2, 1>, scalar_prefetch = 0 : i64, scratch_operands = 0 : i64, tpu.core_type = #tpu.core_type<tc>, window_params = [{transform_indices = @transform_0, window_bounds = array<i64: 16, 128>}, {transform_indices = @transform_1, window_bounds = array<i64: 16, 128>}, {transform_indices = @transform_2, window_bounds = array<i64: 16, 128>}, {transform_indices = @transform_3, window_bounds = array<i64: 8, 128>}, {transform_indices = @transform_4, window_bounds = array<i64: 8, 128>}, {transform_indices = @transform_5, window_bounds = array<i64: 8, 128>}]} {
    %c1_i32 = arith.constant 1 : i32
    %0 = arith.muli %arg0, %c1_i32 : i32
    %1 = arith.addi %0, %arg1 : i32
    %c0_i32 = arith.constant 0 : i32
    %2 = arith.cmpi eq, %arg1, %c0_i32 : i32
    %3 = arith.extui %2 : i1 to i32
    %c0_i32_0 = arith.constant 0 : i32
    %4 = arith.cmpi ne, %3, %c0_i32_0 : i32
    scf.if %4 {
      %cst = arith.constant 0.000000e+00 : f32
      %11 = vector.broadcast %cst : f32 to vector<8x128xf32>
      %c0 = arith.constant 0 : index
      %c0_5 = arith.constant 0 : index
      %12 = vector.load %arg6[%c0, %c0_5] : memref<8x128xf32, #tpu.memory_space<vmem>>, vector<8x128xf32>
      tpu.vector_store %arg6[%c0, %c0_5], %11 {strides = array<i32>} : memref<8x128xf32, #tpu.memory_space<vmem>>, vector<8x128xf32>,
      %cst_6 = arith.constant 0.000000e+00 : f32
      %13 = vector.broadcast %cst_6 : f32 to vector<8x128xf32>
      %c0_7 = arith.constant 0 : index
      %c0_8 = arith.constant 0 : index
      %14 = vector.load %arg7[%c0_7, %c0_8] : memref<8x128xf32, #tpu.memory_space<vmem>>, vector<8x128xf32>
      tpu.vector_store %arg7[%c0_7, %c0_8], %13 {strides = array<i32>} : memref<8x128xf32, #tpu.memory_space<vmem>>, vector<8x128xf32>,
    } else {
    }
    %c0_i32_1 = arith.constant 0 : i32
    %5 = arith.cmpi eq, %1, %c0_i32_1 : i32
    %6 = arith.extui %5 : i1 to i32
    %c0_i32_2 = arith.constant 0 : i32
    %7 = arith.cmpi ne, %6, %c0_i32_2 : i32
    scf.if %7 {
      %c0 = arith.constant 0 : index
      %c0_5 = arith.constant 0 : index
      %11 = vector.load %arg6[%c0, %c0_5] : memref<8x128xf32, #tpu.memory_space<vmem>>, vector<8x128xf32>
      %cst = arith.constant 0.000000e+00 : f32
      %12 = vector.broadcast %cst : f32 to vector<8x128xf32>
      %c0_i32_6 = arith.constant 0 : i32
      %c16_i32 = arith.constant 16 : i32
      %13 = arith.muli %c0_i32_6, %c16_i32 : i32
      %14 = tpu.assume_multiple %13, 16 : i32
      %15 = arith.index_cast %14 : i32 to index
      %c0_7 = arith.constant 0 : index
      %16 = vector.load %arg4[%15, %c0_7] : memref<16x128xf32, #tpu.memory_space<vmem>>, vector<16x128xf32>
      %17 = arith.index_cast %14 : i32 to index
      %c0_8 = arith.constant 0 : index
      %18 = vector.load %arg2[%17, %c0_8] : memref<16x128xf32, #tpu.memory_space<vmem>>, vector<16x128xf32>
      %19 = arith.subf %18, %16 : vector<16x128xf32>
      %20 = math.absf %19 : vector<16x128xf32>
      %cst_9 = arith.constant 1.000000e+01 : f32
      %21 = vector.broadcast %cst_9 : f32 to vector<16x128xf32>
      %22 = arith.mulf %21, %20 : vector<16x128xf32>
      %23 = arith.index_cast %14 : i32 to index
      %c0_10 = arith.constant 0 : index
      %24 = vector.load %arg3[%23, %c0_10] : memref<16x128xf32, #tpu.memory_space<vmem>>, vector<16x128xf32>
      %25 = arith.subf %24, %16 : vector<16x128xf32>
      %26 = math.absf %25 : vector<16x128xf32>
      %cst_11 = arith.constant 1.000000e+01 : f32
      %27 = vector.broadcast %cst_11 : f32 to vector<16x128xf32>
      %28 = arith.mulf %27, %26 : vector<16x128xf32>
      %29 = arith.addf %22, %28 : vector<16x128xf32>
      %30 = vector.shape_cast %29 : vector<16x128xf32> to vector<2x8x128xf32>
      %cst_12 = arith.constant dense<0.000000e+00> : vector<8x128xf32>
      %31 = vector.multi_reduction <add>, %30, %cst_12 [0] : vector<2x8x128xf32> to vector<8x128xf32>
      %32 = arith.addf %12, %31 : vector<8x128xf32>
      %c1_i32_13 = arith.constant 1 : i32
      %33 = arith.addf %11, %32 : vector<8x128xf32>
      %c0_14 = arith.constant 0 : index
      %c0_15 = arith.constant 0 : index
      %34 = vector.load %arg6[%c0_14, %c0_15] : memref<8x128xf32, #tpu.memory_space<vmem>>, vector<8x128xf32>
      tpu.vector_store %arg6[%c0_14, %c0_15], %33 {strides = array<i32>} : memref<8x128xf32, #tpu.memory_space<vmem>>, vector<8x128xf32>,
    } else {
    }
    %c1_i32_3 = arith.constant 1 : i32
    %8 = arith.cmpi slt, %1, %c1_i32_3 : i32
    %9 = arith.extui %8 : i1 to i32
    %c0_i32_4 = arith.constant 0 : i32
    %10 = arith.cmpi ne, %9, %c0_i32_4 : i32
    scf.if %10 {
      %c0 = arith.constant 0 : index
      %c0_5 = arith.constant 0 : index
      %11 = vector.load %arg5[%c0, %c0_5] : memref<8x128xf32, #tpu.memory_space<vmem>>, vector<8x128xf32>
      %cst = arith.constant 0.000000e+00 : f32
      %12 = vector.broadcast %cst : f32 to vector<8x128xf32>
      %13 = arith.maximumf %11, %12 : vector<8x128xf32>
      %14 = arith.subf %13, %11 : vector<8x128xf32>
      %15 = math.absf %11 : vector<8x128xf32>
      %cst_6 = arith.constant 0.000000e+00 : f32
      %16 = vector.broadcast %cst_6 : f32 to vector<8x128xf32>
      %17 = arith.subf %16, %15 : vector<8x128xf32>
      %18 = math.exp %17 : vector<8x128xf32>
      %19 = math.log1p %18 : vector<8x128xf32>
      %20 = arith.addf %14, %19 : vector<8x128xf32>
      %c0_7 = arith.constant 0 : index
      %c0_8 = arith.constant 0 : index
      %21 = vector.load %arg7[%c0_7, %c0_8] : memref<8x128xf32, #tpu.memory_space<vmem>>, vector<8x128xf32>
      %22 = vector.shape_cast %20 : vector<8x128xf32> to vector<1x8x128xf32>
      %cst_9 = arith.constant dense<0.000000e+00> : vector<8x128xf32>
      %23 = vector.multi_reduction <add>, %22, %cst_9 [0] : vector<1x8x128xf32> to vector<8x128xf32>
      %24 = arith.addf %21, %23 : vector<8x128xf32>
      %c0_10 = arith.constant 0 : index
      %c0_11 = arith.constant 0 : index
      %25 = vector.load %arg7[%c0_10, %c0_11] : memref<8x128xf32, #tpu.memory_space<vmem>>, vector<8x128xf32>
      tpu.vector_store %arg7[%c0_10, %c0_11], %24 {strides = array<i32>} : memref<8x128xf32, #tpu.memory_space<vmem>>, vector<8x128xf32>,
    } else {
    }
    return
  }
  func.func @transform_0(%arg0: i32, %arg1: i32) -> (i32, i32) {
    %c1_i32 = arith.constant 1 : i32
    %0 = arith.muli %arg0, %c1_i32 : i32
    %1 = arith.addi %0, %arg1 : i32
    %c0_i32 = arith.constant 0 : i32
    %2 = arith.minsi %1, %c0_i32 : i32
    %c0_i32_0 = arith.constant 0 : i32
    %c0_i32_1 = arith.constant 0 : i32
    return %2, %c0_i32_0 : i32, i32
  }
  func.func @transform_1(%arg0: i32, %arg1: i32) -> (i32, i32) {
    %c1_i32 = arith.constant 1 : i32
    %0 = arith.muli %arg0, %c1_i32 : i32
    %1 = arith.addi %0, %arg1 : i32
    %c0_i32 = arith.constant 0 : i32
    %2 = arith.minsi %1, %c0_i32 : i32
    %c0_i32_0 = arith.constant 0 : i32
    %c0_i32_1 = arith.constant 0 : i32
    return %2, %c0_i32_0 : i32, i32
  }
  func.func @transform_2(%arg0: i32, %arg1: i32) -> (i32, i32) {
    %c1_i32 = arith.constant 1 : i32
    %0 = arith.muli %arg0, %c1_i32 : i32
    %1 = arith.addi %0, %arg1 : i32
    %c0_i32 = arith.constant 0 : i32
    %2 = arith.minsi %1, %c0_i32 : i32
    %c0_i32_0 = arith.constant 0 : i32
    %c0_i32_1 = arith.constant 0 : i32
    return %2, %c0_i32_0 : i32, i32
  }
  func.func @transform_3(%arg0: i32, %arg1: i32) -> (i32, i32) {
    %c1_i32 = arith.constant 1 : i32
    %0 = arith.muli %arg0, %c1_i32 : i32
    %1 = arith.addi %0, %arg1 : i32
    %c0_i32 = arith.constant 0 : i32
    %2 = arith.minsi %1, %c0_i32 : i32
    %c0_i32_0 = arith.constant 0 : i32
    %c0_i32_1 = arith.constant 0 : i32
    return %2, %c0_i32_0 : i32, i32
  }
  func.func @transform_4(%arg0: i32, %arg1: i32) -> (i32, i32) {
    %c0_i32 = arith.constant 0 : i32
    %c0_i32_0 = arith.constant 0 : i32
    return %arg0, %c0_i32 : i32, i32
  }
  func.func @transform_5(%arg0: i32, %arg1: i32) -> (i32, i32) {
    %c0_i32 = arith.constant 0 : i32
    %c0_i32_0 = arith.constant 0 : i32
    return %arg0, %c0_i32 : i32, i32
  }
}

</mosaic_0001>

<llo_original>
// kernel: generator_loss.1
$region0: #{generator_loss.1}
  #allocation0 [shape = 'u32[]', space=smem, size = 0x4, offset = 0x4, fixed_abs, tag = 'smem constant byte address 0x4 - core index']
  #allocation1 [shape = 'u32[144,128]{1,0:T(1,128)}', space=vmem, size = 0x12000, scoped, tag = 'internal scratch']
  %s0 = inlined_call_operand.vmem [shape: f32[16,128], index: 0, kind: input, shape index: {}]
  %s1 = inlined_call_operand.vmem [shape: f32[16,128], index: 1, kind: input, shape index: {}]
  %s2 = inlined_call_operand.vmem [shape: f32[16,128], index: 2, kind: input, shape index: {}]
  %s3 = inlined_call_operand.vmem [shape: f32[8,128], index: 3, kind: input, shape index: {}]
  %s4 = inlined_call_operand.vmem [shape: f32[16,128], index: 4, kind: output, shape index: {0}]
  %s5 = inlined_call_operand.vmem [shape: f32[16,128], index: 5, kind: output, shape index: {1}]
  %6 = xla_tuple %s4, %s5
  %s7 = sld [smem:[#allocation0]]
  $region69: #{generator_loss.1} parent=0
    _
  %s9 = ssub.s32 1, %s7
  %s10 = scalar_select 0, %s9, %s7
  loop: start=0, step=1, limit=4
  $region2: #{generator_loss.1} parent=0 // loop_pre_header
    _
  $region3: #{generator_loss.1} parent=0 // loop_header
    %s12 = sphi 0, %s16
    %p13 = scmp.ge.s32.totalorder %s12, 4
    %s19 = sphi 0, %s31
    %s20 = sphi 0, %s27
    %s21 = sphi 0, %s19
    %s22 = sphi 0, %s20
    %s23 = sphi 0, %s21
    %s24 = sphi 0, %s22
    %s40 = sphi 0, %s42
    %s43 = sphi 0, %s40
    %s44 = sphi 0, %s43
    %s60 = sphi 0, %s44
    %s72 = sphi 0, %s74
    %s75 = sphi 0, %s72
    %s76 = sphi 0, %s75
    %s92 = sphi 0, %s76
    %s104 = sphi 0, %s106
    %s107 = sphi 0, %s104
    %s108 = sphi 0, %s107
    %s124 = sphi 0, %s108
    %s136 = sphi 0, %s138
    %s139 = sphi 0, %s136
    %s140 = sphi 0, %s139
    %s156 = sphi 0, %s140
    %s162 = sphi 0, %s164
    %s165 = sphi 0, %s162
    %s166 = sphi 0, %s165
    %s182 = sphi 0, %s166
    %s188 = sphi 0, %s190
    %s191 = sphi 0, %s188
    %s192 = sphi 0, %s191
    %s208 = sphi 0, %s192
  $region4: #{generator_loss.1} parent=0 // loop_header_branch
    %15 = sbr.rel (%p13) target = $region8
  $region5: #{generator_loss.1} parent=0 // loop_body
    %s17 = ssub.s32 %s12, 1
    %s18 = ssub.s32 %s12, 2
    %s25 = sadd.s32 1, %s20
    %p26 = scmp.ge.s32.totalorder %s25, 1
    %s27 = scalar_select %p26, 0, %s25
    %s28 = sadd.s32 1, %s19
    %s29 = scalar_select %p26, %s28, %s19
    %p30 = scmp.ge.s32.totalorder %s29, 2
    %s31 = scalar_select %p30, 0, %s29
    %s32 = sadd.s32 %s19, %s20
    %p33 = scmp.lt.s32.totalorder %s32, 0
    %s34 = scalar_select %p33, %s32, 0
    %s35 = sadd.s32 %s31, %s27
    %p36 = scmp.lt.s32.totalorder %s35, 0
    %s37 = scalar_select %p36, %s35, 0
    %s38 = ssub.s32 %s34, %s37
    %p39 = scmp.eq.s32.totalorder %s38, 0
    %s41 = sadd.s32 %s40, 1
    %s42 = scalar_select %p39, %s40, %s41
    %p45 = pneg %p39
    %p46 = scmp.eq.s32.totalorder %s12, 1
    %p47 = por %p45, %p46
    %p48 = scmp.ne.s32.totalorder %s40, %s43
    %p49 = scmp.eq.s32.totalorder %s12, 0
    %p50 = por %p48, %p49
    %p51 = scmp.ne.s32.totalorder %s40, %s43
    %p52 = scmp.eq.s32.totalorder %s17, 1
    %p53 = por %p51, %p52
    %p54 = scmp.ne.s32.totalorder %s43, %s44
    %p55 = scmp.eq.s32.totalorder %s17, 0
    %p56 = por %p54, %p55
    %p57 = scmp.ne.s32.totalorder %s43, %s44
    %p58 = scmp.eq.s32.totalorder %s18, 1
    %p59 = por %p57, %p58
    %p61 = scmp.ne.s32.totalorder %s44, %s60
    %p62 = scmp.eq.s32.totalorder %s18, 0
    %p63 = por %p61, %p62
    %s64 = sadd.s32 %s19, %s20
    %p65 = scmp.lt.s32.totalorder %s64, 0
    %s66 = scalar_select %p65, %s64, 0
    %s67 = sadd.s32 %s31, %s27
    %p68 = scmp.lt.s32.totalorder %s67, 0
    %s69 = scalar_select %p68, %s67, 0
    %s70 = ssub.s32 %s66, %s69
    %p71 = scmp.eq.s32.totalorder %s70, 0
    %s73 = sadd.s32 %s72, 1
    %s74 = scalar_select %p71, %s72, %s73
    %p77 = pneg %p71
    %p78 = scmp.eq.s32.totalorder %s12, 1
    %p79 = por %p77, %p78
    %p80 = scmp.ne.s32.totalorder %s72, %s75
    %p81 = scmp.eq.s32.totalorder %s12, 0
    %p82 = por %p80, %p81
    %p83 = scmp.ne.s32.totalorder %s72, %s75
    %p84 = scmp.eq.s32.totalorder %s17, 1
    %p85 = por %p83, %p84
    %p86 = scmp.ne.s32.totalorder %s75, %s76
    %p87 = scmp.eq.s32.totalorder %s17, 0
    %p88 = por %p86, %p87
    %p89 = scmp.ne.s32.totalorder %s75, %s76
    %p90 = scmp.eq.s32.totalorder %s18, 1
    %p91 = por %p89, %p90
    %p93 = scmp.ne.s32.totalorder %s76, %s92
    %p94 = scmp.eq.s32.totalorder %s18, 0
    %p95 = por %p93, %p94
    %s96 = sadd.s32 %s19, %s20
    %p97 = scmp.lt.s32.totalorder %s96, 0
    %s98 = scalar_select %p97, %s96, 0
    %s99 = sadd.s32 %s31, %s27
    %p100 = scmp.lt.s32.totalorder %s99, 0
    %s101 = scalar_select %p100, %s99, 0
    %s102 = ssub.s32 %s98, %s101
    %p103 = scmp.eq.s32.totalorder %s102, 0
    %s105 = sadd.s32 %s104, 1
    %s106 = scalar_select %p103, %s104, %s105
    %p109 = pneg %p103
    %p110 = scmp.eq.s32.totalorder %s12, 1
    %p111 = por %p109, %p110
    %p112 = scmp.ne.s32.totalorder %s104, %s107
    %p113 = scmp.eq.s32.totalorder %s12, 0
    %p114 = por %p112, %p113
    %p115 = scmp.ne.s32.totalorder %s104, %s107
    %p116 = scmp.eq.s32.totalorder %s17, 1
    %p117 = por %p115, %p116
    %p118 = scmp.ne.s32.totalorder %s107, %s108
    %p119 = scmp.eq.s32.totalorder %s17, 0
    %p120 = por %p118, %p119
    %p121 = scmp.ne.s32.totalorder %s107, %s108
    %p122 = scmp.eq.s32.totalorder %s18, 1
    %p123 = por %p121, %p122
    %p125 = scmp.ne.s32.totalorder %s108, %s124
    %p126 = scmp.eq.s32.totalorder %s18, 0
    %p127 = por %p125, %p126
    %s128 = sadd.s32 %s19, %s20
    %p129 = scmp.lt.s32.totalorder %s128, 0
    %s130 = scalar_select %p129, %s128, 0
    %s131 = sadd.s32 %s31, %s27
    %p132 = scmp.lt.s32.totalorder %s131, 0
    %s133 = scalar_select %p132, %s131, 0
    %s134 = ssub.s32 %s130, %s133
    %p135 = scmp.eq.s32.totalorder %s134, 0
    %s137 = sadd.s32 %s136, 1
    %s138 = scalar_select %p135, %s136, %s137
    %p141 = pneg %p135
    %p142 = scmp.eq.s32.totalorder %s12, 1
    %p143 = por %p141, %p142
    %p144 = scmp.ne.s32.totalorder %s136, %s139
    %p145 = scmp.eq.s32.totalorder %s12, 0
    %p146 = por %p144, %p145
    %p147 = scmp.ne.s32.totalorder %s136, %s139
    %p148 = scmp.eq.s32.totalorder %s17, 1
    %p149 = por %p147, %p148
    %p150 = scmp.ne.s32.totalorder %s139, %s140
    %p151 = scmp.eq.s32.totalorder %s17, 0
    %p152 = por %p150, %p151
    %p153 = scmp.ne.s32.totalorder %s139, %s140
    %p154 = scmp.eq.s32.totalorder %s18, 1
    %p155 = por %p153, %p154
    %p157 = scmp.ne.s32.totalorder %s140, %s156
    %p158 = scmp.eq.s32.totalorder %s18, 0
    %p159 = por %p157, %p158
    %s160 = ssub.s32 %s19, %s31
    %p161 = scmp.eq.s32.totalorder %s160, 0
    %s163 = sadd.s32 %s162, 1
    %s164 = scalar_select %p161, %s162, %s163
    %p167 = pneg %p161
    %p168 = scmp.eq.s32.totalorder %s12, 1
    %p169 = por %p167, %p168
    %p170 = scmp.ne.s32.totalorder %s162, %s165
    %p171 = scmp.eq.s32.totalorder %s12, 0
    %p172 = por %p170, %p171
    %p173 = scmp.ne.s32.totalorder %s162, %s165
    %p174 = scmp.eq.s32.totalorder %s17, 1
    %p175 = por %p173, %p174
    %p176 = scmp.ne.s32.totalorder %s165, %s166
    %p177 = scmp.eq.s32.totalorder %s17, 0
    %p178 = por %p176, %p177
    %p179 = scmp.ne.s32.totalorder %s165, %s166
    %p180 = scmp.eq.s32.totalorder %s18, 1
    %p181 = por %p179, %p180
    %p183 = scmp.ne.s32.totalorder %s166, %s182
    %p184 = scmp.eq.s32.totalorder %s18, 0
    %p185 = por %p183, %p184
    %s186 = ssub.s32 %s19, %s31
    %p187 = scmp.eq.s32.totalorder %s186, 0
    %s189 = sadd.s32 %s188, 1
    %s190 = scalar_select %p187, %s188, %s189
    %p193 = pneg %p187
    %p194 = scmp.eq.s32.totalorder %s12, 1
    %p195 = por %p193, %p194
    %p196 = scmp.ne.s32.totalorder %s188, %s191
    %p197 = scmp.eq.s32.totalorder %s12, 0
    %p198 = por %p196, %p197
    %p199 = scmp.ne.s32.totalorder %s188, %s191
    %p200 = scmp.eq.s32.totalorder %s17, 1
    %p201 = por %p199, %p200
    %p202 = scmp.ne.s32.totalorder %s191, %s192
    %p203 = scmp.eq.s32.totalorder %s17, 0
    %p204 = por %p202, %p203
    %p205 = scmp.ne.s32.totalorder %s191, %s192
    %p206 = scmp.eq.s32.totalorder %s18, 1
    %p207 = por %p205, %p206
    %p209 = scmp.ne.s32.totalorder %s192, %s208
    %p210 = scmp.eq.s32.totalorder %s18, 0
    %p211 = por %p209, %p210
    %p212 = scmp.le.s32.totalorder 1, %s12
    %p213 = scmp.lt.s32.totalorder %s12, 3
    %p214 = pnand %p212, %p213
    %p215 = pneg %p214
    // Predicated region
    $region9: #{generator_loss.1} parent=5 // pred_check
      _
    $region10: #{generator_loss.1} parent=5 // pred_check_branch
      %217 = sbr.rel (%p214) target = $region12
    $region11: #{generator_loss.1} parent=5 // pred_region
      %s218 = ssub.s32 %s12, 1
    $region12: #{generator_loss.1} parent=5 // pred_fallthru
      _
    %p219 = scmp.lt.s32.totalorder %s12, 2
    // Predicated region
    $region13: #{generator_loss.1} parent=5 // pred_check
      %p220 = pneg %p219
    $region14: #{generator_loss.1} parent=5 // pred_check_branch
      %222 = sbr.rel (%p220) target = $region16
    $region15: #{generator_loss.1} parent=5 // pred_region
      // Predicated region
      $region17: #{generator_loss.1} parent=15 // pred_check
        %p223 = pneg %p50
      $region18: #{generator_loss.1} parent=15 // pred_check_branch
        %225 = sbr.rel (%p223) target = $region20
      $region19: #{generator_loss.1} parent=15 // pred_region
        %s226 = sadd.s32 %s19, %s20
        %p227 = scmp.lt.s32.totalorder %s226, 0
        %s228 = scalar_select %p227, %s226, 0
        %s229 = smul.u32 2, %s228
        %p230 = scmp.lt.s32.totalorder %s229, 1
        %s231 = scalar_select %p230, %s229, 1
        %s232 = smul.addr %s231, 8
        %s233 = scalar_lea.vmem %s0, %s232
        %s234 = sadd.s32 %s19, %s20
        %p235 = scmp.lt.s32.totalorder %s234, 0
        %s236 = scalar_select %p235, %s234, 0
        %s237 = smul.u32 2, %s236
      $region20: #{generator_loss.1} parent=15 // pred_fallthru
        _
      // Predicated region
      $region21: #{generator_loss.1} parent=15 // pred_check
        %p238 = pneg %p82
      $region22: #{generator_loss.1} parent=15 // pred_check_branch
        %240 = sbr.rel (%p238) target = $region24
      $region23: #{generator_loss.1} parent=15 // pred_region
        %s241 = sadd.s32 %s19, %s20
        %p242 = scmp.lt.s32.totalorder %s241, 0
        %s243 = scalar_select %p242, %s241, 0
        %s244 = smul.u32 2, %s243
        %p245 = scmp.lt.s32.totalorder %s244, 1
        %s246 = scalar_select %p245, %s244, 1
        %s247 = smul.addr %s246, 8
        %s248 = scalar_lea.vmem %s1, %s247
        %s249 = sadd.s32 %s19, %s20
        %p250 = scmp.lt.s32.totalorder %s249, 0
        %s251 = scalar_select %p250, %s249, 0
        %s252 = smul.u32 2, %s251
      $region24: #{generator_loss.1} parent=15 // pred_fallthru
        _
      // Predicated region
      $region25: #{generator_loss.1} parent=15 // pred_check
        %p253 = pneg %p114
      $region26: #{generator_loss.1} parent=15 // pred_check_branch
        %255 = sbr.rel (%p253) target = $region28
      $region27: #{generator_loss.1} parent=15 // pred_region
        %s256 = sadd.s32 %s19, %s20
        %p257 = scmp.lt.s32.totalorder %s256, 0
        %s258 = scalar_select %p257, %s256, 0
        %s259 = smul.u32 2, %s258
        %p260 = scmp.lt.s32.totalorder %s259, 1
        %s261 = scalar_select %p260, %s259, 1
        %s262 = smul.addr %s261, 8
        %s263 = scalar_lea.vmem %s2, %s262
        %s264 = sadd.s32 %s19, %s20
        %p265 = scmp.lt.s32.totalorder %s264, 0
        %s266 = scalar_select %p265, %s264, 0
        %s267 = smul.u32 2, %s266
      $region28: #{generator_loss.1} parent=15 // pred_fallthru
        _
      // Predicated region
      $region29: #{generator_loss.1} parent=15 // pred_check
        %p268 = pneg %p146
      $region30: #{generator_loss.1} parent=15 // pred_check_branch
        %270 = sbr.rel (%p268) target = $region32
      $region31: #{generator_loss.1} parent=15 // pred_region
        %s271 = sadd.s32 %s19, %s20
        %p272 = scmp.lt.s32.totalorder %s271, 0
        %s273 = scalar_select %p272, %s271, 0
        %p274 = scmp.lt.s32.totalorder %s273, 0
        %s275 = scalar_select %p274, %s273, 0
        %s276 = smul.addr %s275, 8
        %s277 = scalar_lea.vmem %s3, %s276
        %s278 = sadd.s32 %s19, %s20
        %p279 = scmp.lt.s32.totalorder %s278, 0
        %s280 = scalar_select %p279, %s278, 0
      $region32: #{generator_loss.1} parent=15 // pred_fallthru
        _
    $region16: #{generator_loss.1} parent=5 // pred_fallthru
      _
    %p281 = scmp.le.s32.totalorder 1, %s12
    %p282 = scmp.lt.s32.totalorder %s12, 3
    %p283 = pnand %p281, %p282
    %p284 = pneg %p283
    // Predicated region
    $region33: #{generator_loss.1} parent=5 // pred_check
      _
    $region34: #{generator_loss.1} parent=5 // pred_check_branch
      %286 = sbr.rel (%p283) target = $region36
    $region35: #{generator_loss.1} parent=5 // pred_region
      %s287 = ssub.s32 %s12, 1
      %s288 = sadd.s32 %s21, %s22
      %p289 = scmp.lt.s32.totalorder %s288, 0
      %s290 = scalar_select %p289, %s288, 0
      %s291 = smul.u32 2, %s290
      %p292 = scmp.lt.s32.totalorder %s291, 1
      %s293 = scalar_select %p292, %s291, 1
      %s294 = smul.addr %s293, 8
      %s295 = scalar_lea.vmem %s0, %s294
      %p296 = pneg %p56
      %p297 = pneg %p53
      %s298 = sadd.s32 %s21, %s22
      %p299 = scmp.lt.s32.totalorder %s298, 0
      %s300 = scalar_select %p299, %s298, 0
      %s301 = smul.u32 2, %s300
      %p302 = scmp.lt.s32.totalorder %s301, 1
      %s303 = scalar_select %p302, %s301, 1
      %s304 = smul.addr %s303, 8
      %s305 = scalar_lea.vmem %s1, %s304
      %p306 = pneg %p88
      %p307 = pneg %p85
      %s308 = sadd.s32 %s21, %s22
      %p309 = scmp.lt.s32.totalorder %s308, 0
      %s310 = scalar_select %p309, %s308, 0
      %s311 = smul.u32 2, %s310
      %p312 = scmp.lt.s32.totalorder %s311, 1
      %s313 = scalar_select %p312, %s311, 1
      %s314 = smul.addr %s313, 8
      %s315 = scalar_lea.vmem %s2, %s314
      %p316 = pneg %p120
      %p317 = pneg %p117
      %s318 = sadd.s32 %s21, %s22
      %p319 = scmp.lt.s32.totalorder %s318, 0
      %s320 = scalar_select %p319, %s318, 0
      %p321 = scmp.lt.s32.totalorder %s320, 0
      %s322 = scalar_select %p321, %s320, 0
      %s323 = smul.addr %s322, 8
      %s324 = scalar_lea.vmem %s3, %s323
      %p325 = pneg %p152
      %p326 = pneg %p149
      %p327 = pneg %p178
      %p328 = pneg %p175
      %p329 = scmp.lt.s32.totalorder %s21, 1
      %s330 = scalar_select %p329, %s21, 1
      %s331 = smul.addr %s330, 8
      %s332 = scalar_lea.vmem %s4, %s331
      %p333 = pneg %p204
      %p334 = pneg %p201
      %p335 = scmp.lt.s32.totalorder %s21, 1
      %s336 = scalar_select %p335, %s21, 1
      %s337 = smul.addr %s336, 8
      %s338 = scalar_lea.vmem %s5, %s337
      %s339 = sadd.s32 %s21, %s22
      %p340 = scmp.lt.s32.totalorder %s339, 0
      %s341 = scalar_select %p340, %s339, 0
      %s342 = smul.u32 2, %s341
      %p343 = scmp.lt.s32.totalorder %s342, 1
      %s344 = scalar_select %p343, %s342, 1
      %s345 = smul.addr %s344, 8
      %s346 = scalar_lea.vmem %s0, %s345
      %s347 = sadd.s32 %s21, %s22
      %p348 = scmp.lt.s32.totalorder %s347, 0
      %s349 = scalar_select %p348, %s347, 0
      %s350 = smul.u32 2, %s349
      %s351 = sadd.s32 %s21, %s22
      %p352 = scmp.lt.s32.totalorder %s351, 0
      %s353 = scalar_select %p352, %s351, 0
      %s354 = smul.u32 2, %s353
      %p355 = scmp.lt.s32.totalorder %s354, 1
      %s356 = scalar_select %p355, %s354, 1
      %s357 = smul.addr %s356, 8
      %s358 = scalar_lea.vmem %s1, %s357
      %s359 = sadd.s32 %s21, %s22
      %p360 = scmp.lt.s32.totalorder %s359, 0
      %s361 = scalar_select %p360, %s359, 0
      %s362 = smul.u32 2, %s361
      %s363 = sadd.s32 %s21, %s22
      %p364 = scmp.lt.s32.totalorder %s363, 0
      %s365 = scalar_select %p364, %s363, 0
      %s366 = smul.u32 2, %s365
      %p367 = scmp.lt.s32.totalorder %s366, 1
      %s368 = scalar_select %p367, %s366, 1
      %s369 = smul.addr %s368, 8
      %s370 = scalar_lea.vmem %s2, %s369
      %s371 = sadd.s32 %s21, %s22
      %p372 = scmp.lt.s32.totalorder %s371, 0
      %s373 = scalar_select %p372, %s371, 0
      %s374 = smul.u32 2, %s373
      %s375 = sadd.s32 %s21, %s22
      %p376 = scmp.lt.s32.totalorder %s375, 0
      %s377 = scalar_select %p376, %s375, 0
      %p378 = scmp.lt.s32.totalorder %s377, 0
      %s379 = scalar_select %p378, %s377, 0
      %s380 = smul.addr %s379, 8
      %s381 = scalar_lea.vmem %s3, %s380
      %s382 = sadd.s32 %s21, %s22
      %p383 = scmp.lt.s32.totalorder %s382, 0
      %s384 = scalar_select %p383, %s382, 0
      %p385 = scmp.lt.s32.totalorder %s21, 1
      %s386 = scalar_select %p385, %s21, 1
      %s387 = smul.addr %s386, 8
      %s388 = scalar_lea.vmem %s4, %s387
      %p389 = scmp.lt.s32.totalorder %s21, 1
      %s390 = scalar_select %p389, %s21, 1
      %s391 = smul.addr %s390, 8
      %s392 = scalar_lea.vmem %s5, %s391
      %s393 = sadd.s32 %s21, %s22
      %p394 = scmp.eq.s32.totalorder %s22, 0
      // Predicated region
      $region37: #{generator_loss.1} parent=35 // pred_check
        %p395 = pneg %p394
      $region38: #{generator_loss.1} parent=35 // pred_check_branch
        %397 = sbr.rel (%p395) target = $region40
      $region39: #{generator_loss.1} parent=35 // pred_region
        %398 = vst [vmem:[%s388] sm:$0xff] 0.0
        %399 = vst [vmem:[%s392] sm:$0xff] 0.0
      $region40: #{generator_loss.1} parent=35 // pred_fallthru
        _
      %p400 = scmp.eq.s32.totalorder %s393, 0
      // Predicated region
      $region41: #{generator_loss.1} parent=35 // pred_check
        %p401 = pneg %p400
      $region42: #{generator_loss.1} parent=35 // pred_check_branch
        %403 = sbr.rel (%p401) target = $region44
      $region43: #{generator_loss.1} parent=35 // pred_region
        %v404 = vld [vmem:[%s388] sm:$0xff]
        %v405 = vld [vmem:[%s370] sm:$0xff]
        %v406 = vld [vmem:[%s370 + $0x8] sm:$0xff]
        %v407 = vld [vmem:[%s346] sm:$0xff]
        %v408 = vld [vmem:[%s346 + $0x8] sm:$0xff]
        %v409 = vsub.f32 %v407, %v405
        %v410 = vsub.f32 %v408, %v406
        %v411 = vand.u32 2147483647, %v409
        %v412 = vand.u32 2147483647, %v410
        %v413 = vmul.f32 %v411, 10.0
        %v414 = vmul.f32 %v412, 10.0
        %v415 = vld [vmem:[%s358] sm:$0xff]
        %v416 = vld [vmem:[%s358 + $0x8] sm:$0xff]
        %v417 = vsub.f32 %v415, %v405
        %v418 = vsub.f32 %v416, %v406
        %v419 = vand.u32 2147483647, %v417
        %v420 = vand.u32 2147483647, %v418
        %v421 = vmul.f32 %v419, 10.0
        %v422 = vmul.f32 %v420, 10.0
        %v423 = vadd.f32 %v413, %v421
        %v424 = vadd.f32 %v414, %v422
        %v425 = vadd.f32 %v423, %v424
        %v426 = vadd.f32 %v425, 0.0
        %v427 = vadd.f32 %v404, %v426
        %428 = vst [vmem:[%s388] sm:$0xff] %v427
      $region44: #{generator_loss.1} parent=35 // pred_fallthru
        _
      %p429 = scmp.lt.s32.totalorder %s393, 1
      // Predicated region
      $region45: #{generator_loss.1} parent=35 // pred_check
        %p430 = pneg %p429
      $region46: #{generator_loss.1} parent=35 // pred_check_branch
        %432 = sbr.rel (%p430) target = $region48
      $region47: #{generator_loss.1} parent=35 // pred_region
        %v433 = vld [vmem:[%s381] sm:$0xff]
        %v434 = vmax.f32 %v433, 0.0
        %v435 = vsub.f32 %v434, %v433
        %v436 = vand.u32 2147483647, %v433
        %v437 = vsub.f32 0.0, %v436
        %v438 = vmul.f32 %v437, 1.442695
        %v439 = vpow.pop %v438
        %v440 = vadd.f32 %v439, 1.0
        %v441 = vlog2.pop %v440
        %v442 = vmul.f32 %v441, 0.6931472
        %v443 = vmul.f32 -0.5, %v439
        %v444 = vadd.f32 %v443, 1.0
        %v445 = vmul.f32 %v444, %v439
        %v446 = vand.u32 2147483647, %v439
        %vm447 = vcmp.lt.f32.partialorder %v446, 0.0004427343
        %v448 = vsel %vm447, %v445, %v442
        %v449 = vadd.f32 %v435, %v448
        %v450 = vld [vmem:[%s392] sm:$0xff]
        %v451 = vadd.f32 %v449, 0.0
        %v452 = vadd.f32 %v450, %v451
        %453 = vst [vmem:[%s392] sm:$0xff] %v452
      $region48: #{generator_loss.1} parent=35 // pred_fallthru
        _
      %p454 = scmp.lt.s32.totalorder %s21, 1
      %s455 = scalar_select %p454, %s21, 1
      %s456 = smul.addr %s455, 8
      %s457 = scalar_lea.vmem %s4, %s456
      %p458 = scmp.lt.s32.totalorder %s21, 1
      %s459 = scalar_select %p458, %s21, 1
      %s460 = smul.addr %s459, 8
      %s461 = scalar_lea.vmem %s5, %s460
      // Predicated region
      $region49: #{generator_loss.1} parent=35 // pred_check
        %p462 = pneg %p175
      $region50: #{generator_loss.1} parent=35 // pred_check_branch
        %464 = sbr.rel (%p462) target = $region52
      $region51: #{generator_loss.1} parent=35 // pred_region
        _
      $region52: #{generator_loss.1} parent=35 // pred_fallthru
        _
      // Predicated region
      $region53: #{generator_loss.1} parent=35 // pred_check
        %p465 = pneg %p201
      $region54: #{generator_loss.1} parent=35 // pred_check_branch
        %467 = sbr.rel (%p465) target = $region56
      $region55: #{generator_loss.1} parent=35 // pred_region
        _
      $region56: #{generator_loss.1} parent=35 // pred_fallthru
        _
    $region36: #{generator_loss.1} parent=5 // pred_fallthru
      _
    %p468 = scmp.le.s32.totalorder 2, %s12
    // Predicated region
    $region57: #{generator_loss.1} parent=5 // pred_check
      %p469 = pneg %p468
    $region58: #{generator_loss.1} parent=5 // pred_check_branch
      %471 = sbr.rel (%p469) target = $region60
    $region59: #{generator_loss.1} parent=5 // pred_region
      %s472 = ssub.s32 %s12, 2
      // Predicated region
      $region61: #{generator_loss.1} parent=59 // pred_check
        %p473 = pneg %p181
      $region62: #{generator_loss.1} parent=59 // pred_check_branch
        %475 = sbr.rel (%p473) target = $region64
      $region63: #{generator_loss.1} parent=59 // pred_region
        %p476 = scmp.lt.s32.totalorder %s23, 1
        %s477 = scalar_select %p476, %s23, 1
        %s478 = smul.addr %s477, 8
        %s479 = scalar_lea.vmem %s4, %s478
      $region64: #{generator_loss.1} parent=59 // pred_fallthru
        _
      // Predicated region
      $region65: #{generator_loss.1} parent=59 // pred_check
        %p480 = pneg %p207
      $region66: #{generator_loss.1} parent=59 // pred_check_branch
        %482 = sbr.rel (%p480) target = $region68
      $region67: #{generator_loss.1} parent=59 // pred_region
        %p483 = scmp.lt.s32.totalorder %s23, 1
        %s484 = scalar_select %p483, %s23, 1
        %s485 = smul.addr %s484, 8
        %s486 = scalar_lea.vmem %s5, %s485
      $region68: #{generator_loss.1} parent=59 // pred_fallthru
        _
    $region60: #{generator_loss.1} parent=5 // pred_fallthru
      _
  $region6: #{generator_loss.1} parent=0 // loop_footer
    %s16 = sadd.s32 1, %s12
  $region7: #{generator_loss.1} parent=0 // loop_footer_branch
    %11 = sbr.rel target = $region3
  $region8: #{generator_loss.1} parent=0 // loop_exit
    _

</llo_original>
